<compile_context>
chip_gen: v7x
topology: tpu7x:2x2x1
jax: 0.10.0
libtpu: 0.0.40
codegen_flags: <defaults>
</compile_context>

<pallas_src>
import functools

import jax
import jax.numpy as jnp
from jax.experimental import pallas as pl
from jax.experimental.pallas import tpu as pltpu


def _lstm_kernel(x_ref, w_ih_ref, w_hh_ref, b_ref, out_ref, xw_scr, *,
                 seq_len, batch, hidden):
    H = hidden
    B = batch

    # ---- Phase 1 (non-recurrent): input projection for ALL timesteps in one
    # wide MXU matmul, bias folded in.  x_ref: (T*B, F) -> xw_scr: (T*B, 4H).
    xw_scr[...] = (
        jnp.dot(x_ref[...], w_ih_ref[...], preferred_element_type=jnp.float32)
        + b_ref[...]
    )

    # Hoisted loop invariants (JAX does not CSE broadcasts inside the loop).
    w_hh = w_hh_ref[...]                                     # (H, 4H), resident
    lane = jax.lax.broadcasted_iota(jnp.int32, (B, 4 * H), 1)
    is_g_lane = (lane >= 2 * H) & (lane < 3 * H)             # tanh lanes [2H,3H)

    # ---- Phase 2: serial recurrence over T, fully unrolled in-kernel.
    def step(t, carry):
        h_prev, c_prev = carry
        row = pl.multiple_of(t * B, B)                       # sublane-aligned
        gates = xw_scr[pl.ds(row, B), :] + jnp.dot(
            h_prev, w_hh, preferred_element_type=jnp.float32)        # (B, 4H)
        # Two full-width EUP pushes + lane-mask blend, then extract gates once.
        act = jnp.where(is_g_lane, jnp.tanh(gates), jax.nn.sigmoid(gates))
        i_g = act[:, 0 * H:1 * H]
        f_g = act[:, 1 * H:2 * H]
        g_g = act[:, 2 * H:3 * H]
        o_g = act[:, 3 * H:4 * H]
        c_new = f_g * c_prev + i_g * g_g
        h_new = o_g * jnp.tanh(c_new)
        return h_new, c_new

    h0 = jnp.zeros((B, H), jnp.float32)
    c0 = jnp.zeros((B, H), jnp.float32)
    h_T, _ = jax.lax.fori_loop(0, seq_len, step, (h0, c0), unroll=True)

    # NOTE: H=32 < 128 lanes -> one masked vst on this single final store;
    # negligible here, widen the output lane dim if H ever grows.
    out_ref[...] = h_T.astype(out_ref.dtype)


def tflstm_forward(x_bft, w_ih_t, w_hh_t, bias):
    """x_bft: (B, F, T) float32 (PyTorch NCW layout before the module's
    transpose(1, 2)).  Returns (B, H) = out[:, -1, :] = h_T."""
    B, F, T = x_bft.shape
    H = w_hh_t.shape[0]
    assert w_ih_t.shape == (F, 4 * H)
    assert w_hh_t.shape == (H, 4 * H)
    assert bias.shape == (1, 4 * H)

    # Time-major and flattened over (T, B) so the in-kernel input projection is
    # a single (T*B, F) x (F, 4H) matmul (absorbs the module's transpose).
    x_flat = jnp.transpose(x_bft, (2, 0, 1)).reshape(T * B, F)

    kernel = functools.partial(_lstm_kernel, seq_len=T, batch=B, hidden=H)

    out = pl.pallas_call(
        kernel,
        out_shape=jax.ShapeDtypeStruct((B, H), jnp.float32),
        # Single invocation (no grid): every operand is a whole-array VMEM block.
        in_specs=[
            pl.BlockSpec(memory_space=pltpu.MemorySpace.VMEM),  # x      (T*B, F)
            pl.BlockSpec(memory_space=pltpu.MemorySpace.VMEM),  # W_ih^T (F, 4H)
            pl.BlockSpec(memory_space=pltpu.MemorySpace.VMEM),  # W_hh^T (H, 4H)
            pl.BlockSpec(memory_space=pltpu.MemorySpace.VMEM),  # bias   (1, 4H)
        ],
        out_specs=pl.BlockSpec(memory_space=pltpu.MemorySpace.VMEM),
        scratch_shapes=[
            pltpu.VMEM((T * B, 4 * H), jnp.float32),  # precomputed x@W_ih + b
        ],
    )(x_flat, w_ih_t, w_hh_t, bias)
    return out


def _reference_lstm(x_bft, w_ih_t, w_hh_t, bias):
    """Pure-JAX reference (lax.scan) matching PyTorch LSTM semantics."""
    B, F, T = x_bft.shape
    H = w_hh_t.shape[0]
    x_tbf = jnp.transpose(x_bft, (2, 0, 1))

    def step(carry, x_t):
        h, c = carry
        gates = x_t @ w_ih_t + h @ w_hh_t + bias
        i = jax.nn.sigmoid(gates[:, 0 * H:1 * H])
        f = jax.nn.sigmoid(gates[:, 1 * H:2 * H])
        g = jnp.tanh(gates[:, 2 * H:3 * H])
        o = jax.nn.sigmoid(gates[:, 3 * H:4 * H])
        c = f * c + i * g
        h = o * jnp.tanh(c)
        return (h, c), None

    init = (jnp.zeros((B, H), jnp.float32), jnp.zeros((B, H), jnp.float32))
    (h_T, _), _ = jax.lax.scan(step, init, x_tbf)
    return h_T


if __name__ == "__main__":
    # Shapes consistent with the module: input_features=240, lstm_nodes=32.
    B, F, T, H = 8, 240, 8, 32

    key = jax.random.PRNGKey(0)
    k_x, k_wih, k_whh, k_bih, k_bhh = jax.random.split(key, 5)

    scale = 1.0 / jnp.sqrt(jnp.float32(H))   # PyTorch LSTM default init range
    x = jax.random.normal(k_x, (B, F, T), jnp.float32)
    # PyTorch stores weight_ih as (4H, F), weight_hh as (4H, H); kept transposed.
    w_ih_t = jax.random.uniform(k_wih, (F, 4 * H), jnp.float32, -scale, scale)
    w_hh_t = jax.random.uniform(k_whh, (H, 4 * H), jnp.float32, -scale, scale)
    b_ih = jax.random.uniform(k_bih, (4 * H,), jnp.float32, -scale, scale)
    b_hh = jax.random.uniform(k_bhh, (4 * H,), jnp.float32, -scale, scale)
    bias = (b_ih + b_hh).reshape(1, 4 * H)

    out = jax.block_until_ready(tflstm_forward(x, w_ih_t, w_hh_t, bias))
    ref = _reference_lstm(x, w_ih_t, w_hh_t, bias)
    assert out.shape == (B, H)
    assert jnp.allclose(out, ref, atol=1e-4, rtol=1e-4), "mismatch vs JAX reference"

    print("KERNEL_OK")
</pallas_src>

<mosaic_0001>
module attributes {stable_mosaic.version = 11 : i64} {
  func.func @_lstm_kernel(%arg0: memref<64x240xf32, #tpu.memory_space<vmem>>, %arg1: memref<240x128xf32, #tpu.memory_space<vmem>>, %arg2: memref<32x128xf32, #tpu.memory_space<vmem>>, %arg3: memref<1x128xf32, #tpu.memory_space<vmem>>, %arg4: memref<8x32xf32, #tpu.memory_space<vmem>>, %arg5: memref<64x128xf32, #tpu.memory_space<vmem>>) attributes {dimension_semantics = [], scalar_prefetch = 0 : i64, scratch_operands = 1 : i64, tpu.core_type = #tpu.core_type<tc>} {
    %c0 = arith.constant 0 : index
    %c0_0 = arith.constant 0 : index
    %0 = vector.load %arg0[%c0, %c0_0] : memref<64x240xf32, #tpu.memory_space<vmem>>, vector<64x240xf32>
    %c0_1 = arith.constant 0 : index
    %c0_2 = arith.constant 0 : index
    %1 = vector.load %arg1[%c0_1, %c0_2] : memref<240x128xf32, #tpu.memory_space<vmem>>, vector<240x128xf32>
    %cst = arith.constant dense<0.000000e+00> : vector<64x128xf32>
    %2 = tpu.matmul %0, %1, %cst {dimension_numbers = #tpu.dot_dimension_numbers<[1], [0], [0], [1], [0, 0, 1, 1], [], []>} : vector<64x240xf32>, vector<240x128xf32>, vector<64x128xf32> -> vector<64x128xf32>
    %c0_3 = arith.constant 0 : index
    %c0_4 = arith.constant 0 : index
    %3 = vector.load %arg3[%c0_3, %c0_4] : memref<1x128xf32, #tpu.memory_space<vmem>>, vector<1x128xf32>
    %4 = vector.broadcast %3 : vector<1x128xf32> to vector<64x128xf32>
    %5 = arith.addf %2, %4 : vector<64x128xf32>
    %c0_5 = arith.constant 0 : index
    %c0_6 = arith.constant 0 : index
    %6 = vector.load %arg5[%c0_5, %c0_6] : memref<64x128xf32, #tpu.memory_space<vmem>>, vector<64x128xf32>
    tpu.vector_store %arg5[%c0_5, %c0_6], %5 {strides = array<i32>} : memref<64x128xf32, #tpu.memory_space<vmem>>, vector<64x128xf32>,
    %c0_7 = arith.constant 0 : index
    %c0_8 = arith.constant 0 : index
    %7 = vector.load %arg2[%c0_7, %c0_8] : memref<32x128xf32, #tpu.memory_space<vmem>>, vector<32x128xf32>
    %8 = tpu.iota {dimensions = array<i32: 1>} : vector<8x128xi32>
    %c64_i32 = arith.constant 64 : i32
    %9 = vector.broadcast %c64_i32 : i32 to vector<8x128xi32>
    %10 = arith.cmpi sge, %8, %9 : vector<8x128xi32>
    %c96_i32 = arith.constant 96 : i32
    %11 = vector.broadcast %c96_i32 : i32 to vector<8x128xi32>
    %12 = arith.cmpi slt, %8, %11 : vector<8x128xi32>
    %13 = arith.andi %10, %12 : vector<8x128xi1>
    %cst_9 = arith.constant 0.000000e+00 : f32
    %14 = vector.broadcast %cst_9 : f32 to vector<8x32xf32>
    %cst_10 = arith.constant 0.000000e+00 : f32
    %15 = vector.broadcast %cst_10 : f32 to vector<8x32xf32>
    %c0_i32 = arith.constant 0 : i32
    %c8_i32 = arith.constant 8 : i32
    %16 = arith.muli %c0_i32, %c8_i32 : i32
    %17 = tpu.assume_multiple %16, 8 : i32
    %18 = arith.index_cast %17 : i32 to index
    %c0_11 = arith.constant 0 : index
    %19 = vector.load %arg5[%18, %c0_11] : memref<64x128xf32, #tpu.memory_space<vmem>>, vector<8x128xf32>
    %cst_12 = arith.constant dense<0.000000e+00> : vector<8x128xf32>
    %20 = tpu.matmul %14, %7, %cst_12 {dimension_numbers = #tpu.dot_dimension_numbers<[1], [0], [0], [1], [0, 0, 1, 1], [], []>} : vector<8x32xf32>, vector<32x128xf32>, vector<8x128xf32> -> vector<8x128xf32>
    %21 = arith.addf %19, %20 : vector<8x128xf32>
    %22 = math.tanh %21 : vector<8x128xf32>
    %23 = arith.negf %21 : vector<8x128xf32>
    %24 = math.exp %23 : vector<8x128xf32>
    %cst_13 = arith.constant 1.000000e+00 : f32
    %25 = vector.broadcast %cst_13 : f32 to vector<8x128xf32>
    %26 = arith.addf %25, %24 : vector<8x128xf32>
    %27 = arith.divf %25, %26 : vector<8x128xf32>
    %28 = arith.select %13, %22, %27 : vector<8x128xi1>, vector<8x128xf32>
    %29 = vector.extract_strided_slice %28 {offsets = [0, 0], sizes = [8, 32], strides = [1, 1]} : vector<8x128xf32> to vector<8x32xf32>
    %30 = vector.extract_strided_slice %28 {offsets = [0, 32], sizes = [8, 32], strides = [1, 1]} : vector<8x128xf32> to vector<8x32xf32>
    %31 = vector.extract_strided_slice %28 {offsets = [0, 64], sizes = [8, 32], strides = [1, 1]} : vector<8x128xf32> to vector<8x32xf32>
    %32 = vector.extract_strided_slice %28 {offsets = [0, 96], sizes = [8, 32], strides = [1, 1]} : vector<8x128xf32> to vector<8x32xf32>
    %33 = arith.mulf %30, %15 : vector<8x32xf32>
    %34 = arith.mulf %29, %31 : vector<8x32xf32>
    %35 = arith.addf %33, %34 : vector<8x32xf32>
    %36 = math.tanh %35 : vector<8x32xf32>
    %37 = arith.mulf %32, %36 : vector<8x32xf32>
    %c1_i32 = arith.constant 1 : i32
    %c8_i32_14 = arith.constant 8 : i32
    %38 = arith.muli %c1_i32, %c8_i32_14 : i32
    %39 = tpu.assume_multiple %38, 8 : i32
    %40 = arith.index_cast %39 : i32 to index
    %c0_15 = arith.constant 0 : index
    %41 = vector.load %arg5[%40, %c0_15] : memref<64x128xf32, #tpu.memory_space<vmem>>, vector<8x128xf32>
    %cst_16 = arith.constant dense<0.000000e+00> : vector<8x128xf32>
    %42 = tpu.matmul %37, %7, %cst_16 {dimension_numbers = #tpu.dot_dimension_numbers<[1], [0], [0], [1], [0, 0, 1, 1], [], []>} : vector<8x32xf32>, vector<32x128xf32>, vector<8x128xf32> -> vector<8x128xf32>
    %43 = arith.addf %41, %42 : vector<8x128xf32>
    %44 = math.tanh %43 : vector<8x128xf32>
    %45 = arith.negf %43 : vector<8x128xf32>
    %46 = math.exp %45 : vector<8x128xf32>
    %cst_17 = arith.constant 1.000000e+00 : f32
    %47 = vector.broadcast %cst_17 : f32 to vector<8x128xf32>
    %48 = arith.addf %47, %46 : vector<8x128xf32>
    %49 = arith.divf %47, %48 : vector<8x128xf32>
    %50 = arith.select %13, %44, %49 : vector<8x128xi1>, vector<8x128xf32>
    %51 = vector.extract_strided_slice %50 {offsets = [0, 0], sizes = [8, 32], strides = [1, 1]} : vector<8x128xf32> to vector<8x32xf32>
    %52 = vector.extract_strided_slice %50 {offsets = [0, 32], sizes = [8, 32], strides = [1, 1]} : vector<8x128xf32> to vector<8x32xf32>
    %53 = vector.extract_strided_slice %50 {offsets = [0, 64], sizes = [8, 32], strides = [1, 1]} : vector<8x128xf32> to vector<8x32xf32>
    %54 = vector.extract_strided_slice %50 {offsets = [0, 96], sizes = [8, 32], strides = [1, 1]} : vector<8x128xf32> to vector<8x32xf32>
    %55 = arith.mulf %52, %35 : vector<8x32xf32>
    %56 = arith.mulf %51, %53 : vector<8x32xf32>
    %57 = arith.addf %55, %56 : vector<8x32xf32>
    %58 = math.tanh %57 : vector<8x32xf32>
    %59 = arith.mulf %54, %58 : vector<8x32xf32>
    %c2_i32 = arith.constant 2 : i32
    %c8_i32_18 = arith.constant 8 : i32
    %60 = arith.muli %c2_i32, %c8_i32_18 : i32
    %61 = tpu.assume_multiple %60, 8 : i32
    %62 = arith.index_cast %61 : i32 to index
    %c0_19 = arith.constant 0 : index
    %63 = vector.load %arg5[%62, %c0_19] : memref<64x128xf32, #tpu.memory_space<vmem>>, vector<8x128xf32>
    %cst_20 = arith.constant dense<0.000000e+00> : vector<8x128xf32>
    %64 = tpu.matmul %59, %7, %cst_20 {dimension_numbers = #tpu.dot_dimension_numbers<[1], [0], [0], [1], [0, 0, 1, 1], [], []>} : vector<8x32xf32>, vector<32x128xf32>, vector<8x128xf32> -> vector<8x128xf32>
    %65 = arith.addf %63, %64 : vector<8x128xf32>
    %66 = math.tanh %65 : vector<8x128xf32>
    %67 = arith.negf %65 : vector<8x128xf32>
    %68 = math.exp %67 : vector<8x128xf32>
    %cst_21 = arith.constant 1.000000e+00 : f32
    %69 = vector.broadcast %cst_21 : f32 to vector<8x128xf32>
    %70 = arith.addf %69, %68 : vector<8x128xf32>
    %71 = arith.divf %69, %70 : vector<8x128xf32>
    %72 = arith.select %13, %66, %71 : vector<8x128xi1>, vector<8x128xf32>
    %73 = vector.extract_strided_slice %72 {offsets = [0, 0], sizes = [8, 32], strides = [1, 1]} : vector<8x128xf32> to vector<8x32xf32>
    %74 = vector.extract_strided_slice %72 {offsets = [0, 32], sizes = [8, 32], strides = [1, 1]} : vector<8x128xf32> to vector<8x32xf32>
    %75 = vector.extract_strided_slice %72 {offsets = [0, 64], sizes = [8, 32], strides = [1, 1]} : vector<8x128xf32> to vector<8x32xf32>
    %76 = vector.extract_strided_slice %72 {offsets = [0, 96], sizes = [8, 32], strides = [1, 1]} : vector<8x128xf32> to vector<8x32xf32>
    %77 = arith.mulf %74, %57 : vector<8x32xf32>
    %78 = arith.mulf %73, %75 : vector<8x32xf32>
    %79 = arith.addf %77, %78 : vector<8x32xf32>
    %80 = math.tanh %79 : vector<8x32xf32>
    %81 = arith.mulf %76, %80 : vector<8x32xf32>
    %c3_i32 = arith.constant 3 : i32
    %c8_i32_22 = arith.constant 8 : i32
    %82 = arith.muli %c3_i32, %c8_i32_22 : i32
    %83 = tpu.assume_multiple %82, 8 : i32
    %84 = arith.index_cast %83 : i32 to index
    %c0_23 = arith.constant 0 : index
    %85 = vector.load %arg5[%84, %c0_23] : memref<64x128xf32, #tpu.memory_space<vmem>>, vector<8x128xf32>
    %cst_24 = arith.constant dense<0.000000e+00> : vector<8x128xf32>
    %86 = tpu.matmul %81, %7, %cst_24 {dimension_numbers = #tpu.dot_dimension_numbers<[1], [0], [0], [1], [0, 0, 1, 1], [], []>} : vector<8x32xf32>, vector<32x128xf32>, vector<8x128xf32> -> vector<8x128xf32>
    %87 = arith.addf %85, %86 : vector<8x128xf32>
    %88 = math.tanh %87 : vector<8x128xf32>
    %89 = arith.negf %87 : vector<8x128xf32>
    %90 = math.exp %89 : vector<8x128xf32>
    %cst_25 = arith.constant 1.000000e+00 : f32
    %91 = vector.broadcast %cst_25 : f32 to vector<8x128xf32>
    %92 = arith.addf %91, %90 : vector<8x128xf32>
    %93 = arith.divf %91, %92 : vector<8x128xf32>
    %94 = arith.select %13, %88, %93 : vector<8x128xi1>, vector<8x128xf32>
    %95 = vector.extract_strided_slice %94 {offsets = [0, 0], sizes = [8, 32], strides = [1, 1]} : vector<8x128xf32> to vector<8x32xf32>
    %96 = vector.extract_strided_slice %94 {offsets = [0, 32], sizes = [8, 32], strides = [1, 1]} : vector<8x128xf32> to vector<8x32xf32>
    %97 = vector.extract_strided_slice %94 {offsets = [0, 64], sizes = [8, 32], strides = [1, 1]} : vector<8x128xf32> to vector<8x32xf32>
    %98 = vector.extract_strided_slice %94 {offsets = [0, 96], sizes = [8, 32], strides = [1, 1]} : vector<8x128xf32> to vector<8x32xf32>
    %99 = arith.mulf %96, %79 : vector<8x32xf32>
    %100 = arith.mulf %95, %97 : vector<8x32xf32>
    %101 = arith.addf %99, %100 : vector<8x32xf32>
    %102 = math.tanh %101 : vector<8x32xf32>
    %103 = arith.mulf %98, %102 : vector<8x32xf32>
    %c4_i32 = arith.constant 4 : i32
    %c8_i32_26 = arith.constant 8 : i32
    %104 = arith.muli %c4_i32, %c8_i32_26 : i32
    %105 = tpu.assume_multiple %104, 8 : i32
    %106 = arith.index_cast %105 : i32 to index
    %c0_27 = arith.constant 0 : index
    %107 = vector.load %arg5[%106, %c0_27] : memref<64x128xf32, #tpu.memory_space<vmem>>, vector<8x128xf32>
    %cst_28 = arith.constant dense<0.000000e+00> : vector<8x128xf32>
    %108 = tpu.matmul %103, %7, %cst_28 {dimension_numbers = #tpu.dot_dimension_numbers<[1], [0], [0], [1], [0, 0, 1, 1], [], []>} : vector<8x32xf32>, vector<32x128xf32>, vector<8x128xf32> -> vector<8x128xf32>
    %109 = arith.addf %107, %108 : vector<8x128xf32>
    %110 = math.tanh %109 : vector<8x128xf32>
    %111 = arith.negf %109 : vector<8x128xf32>
    %112 = math.exp %111 : vector<8x128xf32>
    %cst_29 = arith.constant 1.000000e+00 : f32
    %113 = vector.broadcast %cst_29 : f32 to vector<8x128xf32>
    %114 = arith.addf %113, %112 : vector<8x128xf32>
    %115 = arith.divf %113, %114 : vector<8x128xf32>
    %116 = arith.select %13, %110, %115 : vector<8x128xi1>, vector<8x128xf32>
    %117 = vector.extract_strided_slice %116 {offsets = [0, 0], sizes = [8, 32], strides = [1, 1]} : vector<8x128xf32> to vector<8x32xf32>
    %118 = vector.extract_strided_slice %116 {offsets = [0, 32], sizes = [8, 32], strides = [1, 1]} : vector<8x128xf32> to vector<8x32xf32>
    %119 = vector.extract_strided_slice %116 {offsets = [0, 64], sizes = [8, 32], strides = [1, 1]} : vector<8x128xf32> to vector<8x32xf32>
    %120 = vector.extract_strided_slice %116 {offsets = [0, 96], sizes = [8, 32], strides = [1, 1]} : vector<8x128xf32> to vector<8x32xf32>
    %121 = arith.mulf %118, %101 : vector<8x32xf32>
    %122 = arith.mulf %117, %119 : vector<8x32xf32>
    %123 = arith.addf %121, %122 : vector<8x32xf32>
    %124 = math.tanh %123 : vector<8x32xf32>
    %125 = arith.mulf %120, %124 : vector<8x32xf32>
    %c5_i32 = arith.constant 5 : i32
    %c8_i32_30 = arith.constant 8 : i32
    %126 = arith.muli %c5_i32, %c8_i32_30 : i32
    %127 = tpu.assume_multiple %126, 8 : i32
    %128 = arith.index_cast %127 : i32 to index
    %c0_31 = arith.constant 0 : index
    %129 = vector.load %arg5[%128, %c0_31] : memref<64x128xf32, #tpu.memory_space<vmem>>, vector<8x128xf32>
    %cst_32 = arith.constant dense<0.000000e+00> : vector<8x128xf32>
    %130 = tpu.matmul %125, %7, %cst_32 {dimension_numbers = #tpu.dot_dimension_numbers<[1], [0], [0], [1], [0, 0, 1, 1], [], []>} : vector<8x32xf32>, vector<32x128xf32>, vector<8x128xf32> -> vector<8x128xf32>
    %131 = arith.addf %129, %130 : vector<8x128xf32>
    %132 = math.tanh %131 : vector<8x128xf32>
    %133 = arith.negf %131 : vector<8x128xf32>
    %134 = math.exp %133 : vector<8x128xf32>
    %cst_33 = arith.constant 1.000000e+00 : f32
    %135 = vector.broadcast %cst_33 : f32 to vector<8x128xf32>
    %136 = arith.addf %135, %134 : vector<8x128xf32>
    %137 = arith.divf %135, %136 : vector<8x128xf32>
    %138 = arith.select %13, %132, %137 : vector<8x128xi1>, vector<8x128xf32>
    %139 = vector.extract_strided_slice %138 {offsets = [0, 0], sizes = [8, 32], strides = [1, 1]} : vector<8x128xf32> to vector<8x32xf32>
    %140 = vector.extract_strided_slice %138 {offsets = [0, 32], sizes = [8, 32], strides = [1, 1]} : vector<8x128xf32> to vector<8x32xf32>
    %141 = vector.extract_strided_slice %138 {offsets = [0, 64], sizes = [8, 32], strides = [1, 1]} : vector<8x128xf32> to vector<8x32xf32>
    %142 = vector.extract_strided_slice %138 {offsets = [0, 96], sizes = [8, 32], strides = [1, 1]} : vector<8x128xf32> to vector<8x32xf32>
    %143 = arith.mulf %140, %123 : vector<8x32xf32>
    %144 = arith.mulf %139, %141 : vector<8x32xf32>
    %145 = arith.addf %143, %144 : vector<8x32xf32>
    %146 = math.tanh %145 : vector<8x32xf32>
    %147 = arith.mulf %142, %146 : vector<8x32xf32>
    %c6_i32 = arith.constant 6 : i32
    %c8_i32_34 = arith.constant 8 : i32
    %148 = arith.muli %c6_i32, %c8_i32_34 : i32
    %149 = tpu.assume_multiple %148, 8 : i32
    %150 = arith.index_cast %149 : i32 to index
    %c0_35 = arith.constant 0 : index
    %151 = vector.load %arg5[%150, %c0_35] : memref<64x128xf32, #tpu.memory_space<vmem>>, vector<8x128xf32>
    %cst_36 = arith.constant dense<0.000000e+00> : vector<8x128xf32>
    %152 = tpu.matmul %147, %7, %cst_36 {dimension_numbers = #tpu.dot_dimension_numbers<[1], [0], [0], [1], [0, 0, 1, 1], [], []>} : vector<8x32xf32>, vector<32x128xf32>, vector<8x128xf32> -> vector<8x128xf32>
    %153 = arith.addf %151, %152 : vector<8x128xf32>
    %154 = math.tanh %153 : vector<8x128xf32>
    %155 = arith.negf %153 : vector<8x128xf32>
    %156 = math.exp %155 : vector<8x128xf32>
    %cst_37 = arith.constant 1.000000e+00 : f32
    %157 = vector.broadcast %cst_37 : f32 to vector<8x128xf32>
    %158 = arith.addf %157, %156 : vector<8x128xf32>
    %159 = arith.divf %157, %158 : vector<8x128xf32>
    %160 = arith.select %13, %154, %159 : vector<8x128xi1>, vector<8x128xf32>
    %161 = vector.extract_strided_slice %160 {offsets = [0, 0], sizes = [8, 32], strides = [1, 1]} : vector<8x128xf32> to vector<8x32xf32>
    %162 = vector.extract_strided_slice %160 {offsets = [0, 32], sizes = [8, 32], strides = [1, 1]} : vector<8x128xf32> to vector<8x32xf32>
    %163 = vector.extract_strided_slice %160 {offsets = [0, 64], sizes = [8, 32], strides = [1, 1]} : vector<8x128xf32> to vector<8x32xf32>
    %164 = vector.extract_strided_slice %160 {offsets = [0, 96], sizes = [8, 32], strides = [1, 1]} : vector<8x128xf32> to vector<8x32xf32>
    %165 = arith.mulf %162, %145 : vector<8x32xf32>
    %166 = arith.mulf %161, %163 : vector<8x32xf32>
    %167 = arith.addf %165, %166 : vector<8x32xf32>
    %168 = math.tanh %167 : vector<8x32xf32>
    %169 = arith.mulf %164, %168 : vector<8x32xf32>
    %c7_i32 = arith.constant 7 : i32
    %c8_i32_38 = arith.constant 8 : i32
    %170 = arith.muli %c7_i32, %c8_i32_38 : i32
    %171 = tpu.assume_multiple %170, 8 : i32
    %172 = arith.index_cast %171 : i32 to index
    %c0_39 = arith.constant 0 : index
    %173 = vector.load %arg5[%172, %c0_39] : memref<64x128xf32, #tpu.memory_space<vmem>>, vector<8x128xf32>
    %cst_40 = arith.constant dense<0.000000e+00> : vector<8x128xf32>
    %174 = tpu.matmul %169, %7, %cst_40 {dimension_numbers = #tpu.dot_dimension_numbers<[1], [0], [0], [1], [0, 0, 1, 1], [], []>} : vector<8x32xf32>, vector<32x128xf32>, vector<8x128xf32> -> vector<8x128xf32>
    %175 = arith.addf %173, %174 : vector<8x128xf32>
    %176 = math.tanh %175 : vector<8x128xf32>
    %177 = arith.negf %175 : vector<8x128xf32>
    %178 = math.exp %177 : vector<8x128xf32>
    %cst_41 = arith.constant 1.000000e+00 : f32
    %179 = vector.broadcast %cst_41 : f32 to vector<8x128xf32>
    %180 = arith.addf %179, %178 : vector<8x128xf32>
    %181 = arith.divf %179, %180 : vector<8x128xf32>
    %182 = arith.select %13, %176, %181 : vector<8x128xi1>, vector<8x128xf32>
    %183 = vector.extract_strided_slice %182 {offsets = [0, 0], sizes = [8, 32], strides = [1, 1]} : vector<8x128xf32> to vector<8x32xf32>
    %184 = vector.extract_strided_slice %182 {offsets = [0, 32], sizes = [8, 32], strides = [1, 1]} : vector<8x128xf32> to vector<8x32xf32>
    %185 = vector.extract_strided_slice %182 {offsets = [0, 64], sizes = [8, 32], strides = [1, 1]} : vector<8x128xf32> to vector<8x32xf32>
    %186 = vector.extract_strided_slice %182 {offsets = [0, 96], sizes = [8, 32], strides = [1, 1]} : vector<8x128xf32> to vector<8x32xf32>
    %187 = arith.mulf %184, %167 : vector<8x32xf32>
    %188 = arith.mulf %183, %185 : vector<8x32xf32>
    %189 = arith.addf %187, %188 : vector<8x32xf32>
    %190 = math.tanh %189 : vector<8x32xf32>
    %191 = arith.mulf %186, %190 : vector<8x32xf32>
    %c8_i32_42 = arith.constant 8 : i32
    %c0_43 = arith.constant 0 : index
    %c0_44 = arith.constant 0 : index
    %192 = vector.load %arg4[%c0_43, %c0_44] : memref<8x32xf32, #tpu.memory_space<vmem>>, vector<8x32xf32>
    tpu.vector_store %arg4[%c0_43, %c0_44], %191 {strides = array<i32>} : memref<8x32xf32, #tpu.memory_space<vmem>>, vector<8x32xf32>,
    return
  }
}

</mosaic_0001>

<llo_original>
// kernel: tpu_custom_call.1
$region0: #{tpu_custom_call.1}
  #allocation0 [shape = 'u32[]', space=smem, size = 0x4, offset = 0x4, fixed_abs, tag = 'smem constant byte address 0x4 - core index']
  #allocation1 [shape = 'u32[144,128]{1,0:T(1,128)}', space=vmem, size = 0x12000, scoped, tag = 'internal scratch']
  #allocation2 [shape = 'f32[64,128]{1,0:T(8,128)}', space=vmem, size = 0x8000, scoped, tag = 'scratch operand']
  %s0 = inlined_call_operand.hbm [shape: f32[64,240], index: 0, kind: input, shape index: {}]
  %s1 = inlined_call_operand.hbm [shape: f32[240,128], index: 1, kind: input, shape index: {}]
  %s2 = inlined_call_operand.hbm [shape: f32[32,128], index: 2, kind: input, shape index: {}]
  %s3 = inlined_call_operand.vmem [shape: f32[1,128], index: 3, kind: input, shape index: {}]
  %s4 = inlined_call_operand.hbm [shape: f32[8,32], index: 4, kind: output, shape index: {}]
  %s5 = sld [smem:[#allocation0]]
  $region38: #{tpu_custom_call.1} parent=0
    _
  %s7 = ssub.s32 1, %s5
  %s8 = scalar_select 0, %s7, %s5
  $region1: #{tpu_custom_call.1} parent=0
    #allocation3 [shape = 'u8[65536]{0}', space=vmem, size = 0x10000, scoped, tag = 'input window, operand 0, single buffered']
    #allocation4 [shape = 's32[1]{0}', space=sflag, size = 0x4, scoped, tag = 'scoped memory for tpu_custom_call.1']
    #allocation5 [shape = 's32[1]{0}', space=sflag, size = 0x4, scoped, tag = 'scoped memory for tpu_custom_call.1']
    #allocation6 [shape = 'u8[122880]{0}', space=vmem, size = 0x1e000, scoped, tag = 'input window, operand 1, single buffered']
    #allocation7 [shape = 's32[1]{0}', space=sflag, size = 0x4, scoped, tag = 'scoped memory for tpu_custom_call.1']
    #allocation8 [shape = 'u8[16384]{0}', space=vmem, size = 0x4000, scoped, tag = 'input window, operand 2, single buffered']
    #allocation9 [shape = 'u8[4096]{0}', space=vmem, size = 0x1000, scoped, tag = 'output window, operand 0, single buffered']
    %9 = vsyncpa [#allocation4], 0
    %10 = vsyncpa [#allocation7], 0
    %11 = vsyncpa [#allocation5], 0
    // Predicated region
    $region2: #{tpu_custom_call.1} parent=1 // pred_check
      _
    $region3: #{tpu_custom_call.1} parent=1 // pred_check_branch
      %13 = sbr.rel (0) target = $region5
    $region4: #{tpu_custom_call.1} parent=1 // pred_region
      %s15 = ssub.s32 2048, 2048
      %16 = vsyncadd [#allocation4], %s15
      %s17 = sshll.u32 [#allocation3], 4
      %s18 = int_to_ptr.vmem [resolvable:$true] %s17
      %23 = dma.hbm_to_vmem [thread:$0]  %s0, 2048, %s18, [#allocation4], 256, 256, 16
    $region5: #{tpu_custom_call.1} parent=1 // pred_fallthru
      _
    // Predicated region
    $region6: #{tpu_custom_call.1} parent=1 // pred_check
      _
    $region7: #{tpu_custom_call.1} parent=1 // pred_check_branch
      %25 = sbr.rel (0) target = $region9
    $region8: #{tpu_custom_call.1} parent=1 // pred_region
      %s27 = ssub.s32 3840, 3840
      %28 = vsyncadd [#allocation7], %s27
      %s29 = sshll.u32 [#allocation6], 4
      %s30 = int_to_ptr.vmem [resolvable:$true] %s29
      %35 = dma.hbm_to_vmem [thread:$0]  %s1, 3840, %s30, [#allocation7], 128, 128, 8
    $region9: #{tpu_custom_call.1} parent=1 // pred_fallthru
      _
    // Predicated region
    $region10: #{tpu_custom_call.1} parent=1 // pred_check
      _
    $region11: #{tpu_custom_call.1} parent=1 // pred_check_branch
      %37 = sbr.rel (0) target = $region13
    $region12: #{tpu_custom_call.1} parent=1 // pred_region
      %s39 = ssub.s32 512, 512
      %40 = vsyncadd [#allocation7], %s39
      %s41 = sshll.u32 [#allocation8], 4
      %s42 = int_to_ptr.vmem [resolvable:$true] %s41
      %47 = dma.hbm_to_vmem [thread:$0]  %s2, 512, %s42, [#allocation7], 128, 128, 8
    $region13: #{tpu_custom_call.1} parent=1 // pred_fallthru
      _
    // Predicated region
    $region14: #{tpu_custom_call.1} parent=1 // pred_check
      _
    $region15: #{tpu_custom_call.1} parent=1 // pred_check_branch
      %49 = sbr.rel (0) target = $region17
    $region16: #{tpu_custom_call.1} parent=1 // pred_region
      _
    $region17: #{tpu_custom_call.1} parent=1 // pred_fallthru
      _
    // Predicated region
    $region18: #{tpu_custom_call.1} parent=1 // pred_check
      _
    $region19: #{tpu_custom_call.1} parent=1 // pred_check_branch
      %51 = sbr.rel (0) target = $region21
    $region20: #{tpu_custom_call.1} parent=1 // pred_region
      %52 = dma.done [#allocation4], 2048
    $region21: #{tpu_custom_call.1} parent=1 // pred_fallthru
      _
    // Predicated region
    $region22: #{tpu_custom_call.1} parent=1 // pred_check
      _
    $region23: #{tpu_custom_call.1} parent=1 // pred_check_branch
      %54 = sbr.rel (0) target = $region25
    $region24: #{tpu_custom_call.1} parent=1 // pred_region
      %55 = dma.done [#allocation7], 3840
    $region25: #{tpu_custom_call.1} parent=1 // pred_fallthru
      _
    // Predicated region
    $region26: #{tpu_custom_call.1} parent=1 // pred_check
      _
    $region27: #{tpu_custom_call.1} parent=1 // pred_check_branch
      %57 = sbr.rel (0) target = $region29
    $region28: #{tpu_custom_call.1} parent=1 // pred_region
      %58 = dma.done [#allocation7], 512
    $region29: #{tpu_custom_call.1} parent=1 // pred_fallthru
      _
    %v59 = vld [vmem:[#allocation3] sm:$0xff]
    %v60 = vld [vmem:[#allocation3 + $0x8] sm:$0xff]
    %v61 = vld [vmem:[#allocation3 + $0x10] sm:$0xff]
    %v62 = vld [vmem:[#allocation3 + $0x18] sm:$0xff]
    %v63 = vld [vmem:[#allocation3 + $0x20] sm:$0xff]
    %v64 = vld [vmem:[#allocation3 + $0x28] sm:$0xff]
    %v65 = vld [vmem:[#allocation3 + $0x30] sm:$0xff]
    %v66 = vld [vmem:[#allocation3 + $0x38] sm:$0xff]
    %v67 = vld [vmem:[#allocation3 + $0x40] sm:$0xff]
    %v68 = vld [vmem:[#allocation3 + $0x48] sm:$0xff]
    %v69 = vld [vmem:[#allocation3 + $0x50] sm:$0xff]
    %v70 = vld [vmem:[#allocation3 + $0x58] sm:$0xff]
    %v71 = vld [vmem:[#allocation3 + $0x60] sm:$0xff]
    %v72 = vld [vmem:[#allocation3 + $0x68] sm:$0xff]
    %v73 = vld [vmem:[#allocation3 + $0x70] sm:$0xff]
    %v74 = vld [vmem:[#allocation3 + $0x78] sm:$0xff]
    %v75 = vld [vmem:[#allocation6] sm:$0xff]
    %v76 = vld [vmem:[#allocation6 + $0x8] sm:$0xff]
    %v77 = vld [vmem:[#allocation6 + $0x10] sm:$0xff]
    %v78 = vld [vmem:[#allocation6 + $0x18] sm:$0xff]
    %v79 = vld [vmem:[#allocation6 + $0x20] sm:$0xff]
    %v80 = vld [vmem:[#allocation6 + $0x28] sm:$0xff]
    %v81 = vld [vmem:[#allocation6 + $0x30] sm:$0xff]
    %v82 = vld [vmem:[#allocation6 + $0x38] sm:$0xff]
    %v83 = vld [vmem:[#allocation6 + $0x40] sm:$0xff]
    %v84 = vld [vmem:[#allocation6 + $0x48] sm:$0xff]
    %v85 = vld [vmem:[#allocation6 + $0x50] sm:$0xff]
    %v86 = vld [vmem:[#allocation6 + $0x58] sm:$0xff]
    %v87 = vld [vmem:[#allocation6 + $0x60] sm:$0xff]
    %v88 = vld [vmem:[#allocation6 + $0x68] sm:$0xff]
    %v89 = vld [vmem:[#allocation6 + $0x70] sm:$0xff]
    %v90 = vld [vmem:[#allocation6 + $0x78] sm:$0xff]
    %v91 = vld [vmem:[#allocation6 + $0x80] sm:$0xff]
    %v92 = vld [vmem:[#allocation6 + $0x88] sm:$0xff]
    %v93 = vld [vmem:[#allocation6 + $0x90] sm:$0xff]
    %v94 = vld [vmem:[#allocation6 + $0x98] sm:$0xff]
    %v95 = vld [vmem:[#allocation6 + $0xa0] sm:$0xff]
    %v96 = vld [vmem:[#allocation6 + $0xa8] sm:$0xff]
    %v97 = vld [vmem:[#allocation6 + $0xb0] sm:$0xff]
    %v98 = vld [vmem:[#allocation6 + $0xb8] sm:$0xff]
    %v99 = vld [vmem:[#allocation6 + $0xc0] sm:$0xff]
    %v100 = vld [vmem:[#allocation6 + $0xc8] sm:$0xff]
    %v101 = vld [vmem:[#allocation6 + $0xd0] sm:$0xff]
    %v102 = vld [vmem:[#allocation6 + $0xd8] sm:$0xff]
    %v103 = vld [vmem:[#allocation6 + $0xe0] sm:$0xff]
    %v104 = vld [vmem:[#allocation6 + $0xe8] sm:$0xff]
    %v105 = vld [vmem:[%s3] sm:$0x1]
    %v107 = vlaneseq
    %v108 = vshrl.u32 %v107, 7
    %v109 = vsub.s32 0, %v108
    %v110 = vrot.slane %v105, %v109
    %vm112 = vcmask 916480
    %v114 = vsel %vm112, %v60, 0
    %v117 = vsel %vm112, %v62, 0
    %v120 = vsel %vm112, %v64, 0
    %v123 = vsel %vm112, %v66, 0
    %v126 = vsel %vm112, %v68, 0
    %v129 = vsel %vm112, %v70, 0
    %v132 = vsel %vm112, %v72, 0
    %v135 = vsel %vm112, %v74, 0
    %137 = vmatprep.subr.mxu0 0.0
    %138 = vmatpush1.msra.mxu0 %v75
    %139 = vmatprep.subr.mxu0 0.0
    %140 = vmatpush1.msra.mxu0 %v76
    %141 = vmatprep.subr.mxu0 0.0
    %142 = vmatpush1.msra.mxu0 %v77
    %143 = vmatprep.subr.mxu0 0.0
    %144 = vmatpush1.msra.mxu0 %v78
    %145 = vmatprep.subr.mxu0 0.0
    %146 = vmatpush1.msra.mxu0 %v79
    %147 = vmatprep.subr.mxu0 0.0
    %148 = vmatpush1.msra.mxu0 %v80
    %149 = vmatprep.subr.mxu0 0.0
    %150 = vmatpush1.msra.mxu0 %v81
    %151 = vmatprep.subr.mxu0 0.0
    %152 = vmatpush1.msra.mxu0 %v82
    %153 = vmatprep.subr.mxu0 0.0
    %154 = vmatpush1.msra.mxu0 %v83
    %155 = vmatprep.subr.mxu0 0.0
    %156 = vmatpush1.msra.mxu0 %v84
    %157 = vmatprep.subr.mxu0 0.0
    %158 = vmatpush1.msra.mxu0 %v85
    %159 = vmatprep.subr.mxu0 0.0
    %160 = vmatpush1.msra.mxu0 %v86
    %161 = vmatprep.subr.mxu0 0.0
    %162 = vmatpush1.msra.mxu0 %v87
    %163 = vmatprep.subr.mxu0 0.0
    %164 = vmatpush1.msra.mxu0 %v88
    %165 = vmatprep.subr.mxu0 0.0
    %166 = vmatpush1.msra.mxu0 %v89
    %167 = vmatprep.subr.mxu0 0.0
    %168 = vmatpush1.msra.mxu0 %v90
    %169 = vmatprep.subr.mxu0 0.0
    %170 = vmatpush1.msra.mxu0 %v91
    %171 = vmatprep.subr.mxu0 0.0
    %172 = vmatpush1.msra.mxu0 %v92
    %173 = vmatprep.subr.mxu0 0.0
    %174 = vmatpush1.msra.mxu0 %v93
    %175 = vmatprep.subr.mxu0 0.0
    %176 = vmatpush1.msra.mxu0 %v94
    %177 = vmatprep.subr.mxu0 0.0
    %178 = vmatpush1.msra.mxu0 %v95
    %179 = vmatprep.subr.mxu0 0.0
    %180 = vmatpush1.msra.mxu0 %v96
    %181 = vmatprep.subr.mxu0 0.0
    %182 = vmatpush1.msra.mxu0 %v97
    %183 = vmatprep.subr.mxu0 0.0
    %184 = vmatpush1.msra.mxu0 %v98
    %185 = vmatprep.subr.mxu0 0.0
    %186 = vmatpush1.msra.mxu0 %v99
    %187 = vmatprep.subr.mxu0 0.0
    %188 = vmatpush1.msra.mxu0 %v100
    %189 = vmatprep.subr.mxu0 0.0
    %190 = vmatpush1.msra.mxu0 %v101
    %191 = vmatprep.subr.mxu0 0.0
    %192 = vmatpush1.msra.mxu0 %v102
    %193 = vmatprep.subr.mxu0 0.0
    %194 = vmatpush1.msra.mxu0 %v103
    %195 = vmatprep.subr.mxu0 0.0
    %196 = vmatpush1.msra.mxu0 %v104
    %197 = vmatprep.subr.mxu0 0.0
    %198 = vmatpush1.msra.mxu0 0.0
    %199 = vmatprep.subr.mxu0 0.0
    %200 = vmatpush1.msra.mxu0 0.0
    %201 = vmatprep.mubr.f32.mxu0 %v114
    %202 = vmatmul.mubr.f32.gmra.mrb[0].mxu0 %v59
    %v203 = vpop.f32.mrb[0].mxu0
    %v204 = vadd.f32 %v110, %v203
    %v205 = vpop.f32.mrb[0].mxu0
    %206 = vmatprep.mubr.f32.mxu0 %v117
    %207 = vmatmul.mubr.f32.gmra.mrb[0].mxu0 %v61
    %v208 = vpop.f32.mrb[0].mxu0
    %v209 = vadd.f32 %v110, %v208
    %v210 = vpop.f32.mrb[0].mxu0
    %211 = vmatprep.mubr.f32.mxu0 %v120
    %212 = vmatmul.mubr.f32.gmra.mrb[0].mxu0 %v63
    %v213 = vpop.f32.mrb[0].mxu0
    %v214 = vadd.f32 %v110, %v213
    %v215 = vpop.f32.mrb[0].mxu0
    %216 = vmatprep.mubr.f32.mxu0 %v123
    %217 = vmatmul.mubr.f32.gmra.mrb[0].mxu0 %v65
    %v218 = vpop.f32.mrb[0].mxu0
    %v219 = vadd.f32 %v110, %v218
    %v220 = vpop.f32.mrb[0].mxu0
    %221 = vmatprep.mubr.f32.mxu0 %v126
    %222 = vmatmul.mubr.f32.gmra.mrb[0].mxu0 %v67
    %v223 = vpop.f32.mrb[0].mxu0
    %v224 = vadd.f32 %v110, %v223
    %v225 = vpop.f32.mrb[0].mxu0
    %226 = vmatprep.mubr.f32.mxu0 %v129
    %227 = vmatmul.mubr.f32.gmra.mrb[0].mxu0 %v69
    %v228 = vpop.f32.mrb[0].mxu0
    %v229 = vadd.f32 %v110, %v228
    %v230 = vpop.f32.mrb[0].mxu0
    %231 = vmatprep.mubr.f32.mxu0 %v132
    %232 = vmatmul.mubr.f32.gmra.mrb[0].mxu0 %v71
    %v233 = vpop.f32.mrb[0].mxu0
    %v234 = vadd.f32 %v110, %v233
    %v235 = vpop.f32.mrb[0].mxu0
    %236 = vmatprep.mubr.f32.mxu0 %v135
    %237 = vmatmul.mubr.f32.gmra.mrb[0].mxu0 %v73
    %v238 = vpop.f32.mrb[0].mxu0
    %v239 = vadd.f32 %v110, %v238
    %v240 = vpop.f32.mrb[0].mxu0
    %241 = vdwg.mxu0
    %242 = vst [vmem:[#allocation2] sm:$0xff] %v204
    %243 = vst [vmem:[#allocation2 + $0x8] sm:$0xff] %v209
    %244 = vst [vmem:[#allocation2 + $0x10] sm:$0xff] %v214
    %245 = vst [vmem:[#allocation2 + $0x18] sm:$0xff] %v219
    %246 = vst [vmem:[#allocation2 + $0x20] sm:$0xff] %v224
    %247 = vst [vmem:[#allocation2 + $0x28] sm:$0xff] %v229
    %248 = vst [vmem:[#allocation2 + $0x30] sm:$0xff] %v234
    %249 = vst [vmem:[#allocation2 + $0x38] sm:$0xff] %v239
    %v250 = vld [vmem:[#allocation8] sm:$0xff]
    %v251 = vld [vmem:[#allocation8 + $0x8] sm:$0xff]
    %v252 = vld [vmem:[#allocation8 + $0x10] sm:$0xff]
    %v253 = vld [vmem:[#allocation8 + $0x18] sm:$0xff]
    %v254 = vlaneseq
    %v255 = vand.u32 %v254, 127
    %vm256 = vcmp.ge.s32.totalorder %v255, 64
    %vm257 = vcmp.lt.s32.totalorder %v255, 96
    %vm258 = vmand %vm256, %vm257
    %v259 = vld [vmem:[#allocation2] sm:$0xff]
    %vm260 = vcmask 261120
    %v262 = vsel %vm260, 0.0, 0
    %264 = vmatprep.subr.mxu0 0.0
    %265 = vmatpush1.msra.mxu0 %v250
    %266 = vmatprep.subr.mxu0 0.0
    %267 = vmatpush1.msra.mxu0 %v251
    %268 = vmatprep.subr.mxu0 0.0
    %269 = vmatpush1.msra.mxu0 %v252
    %270 = vmatprep.subr.mxu0 0.0
    %271 = vmatpush1.msra.mxu0 %v253
    %272 = vmatprep.subr.mxu0 0.0
    %273 = vmatpush1.msra.mxu0 0.0
    %274 = vmatprep.subr.mxu0 0.0
    %275 = vmatpush1.msra.mxu0 0.0
    %276 = vmatprep.subr.mxu0 0.0
    %277 = vmatpush1.msra.mxu0 0.0
    %278 = vmatprep.subr.mxu0 0.0
    %279 = vmatpush1.msra.mxu0 0.0
    %280 = vmatprep.subr.mxu0 0.0
    %281 = vmatpush1.msra.mxu0 0.0
    %282 = vmatprep.subr.mxu0 0.0
    %283 = vmatpush1.msra.mxu0 0.0
    %284 = vmatprep.subr.mxu0 0.0
    %285 = vmatpush1.msra.mxu0 0.0
    %286 = vmatprep.subr.mxu0 0.0
    %287 = vmatpush1.msra.mxu0 0.0
    %288 = vmatprep.subr.mxu0 0.0
    %289 = vmatpush1.msra.mxu0 0.0
    %290 = vmatprep.subr.mxu0 0.0
    %291 = vmatpush1.msra.mxu0 0.0
    %292 = vmatprep.subr.mxu0 0.0
    %293 = vmatpush1.msra.mxu0 0.0
    %294 = vmatprep.subr.mxu0 0.0
    %295 = vmatpush1.msra.mxu0 0.0
    %296 = vmatprep.subr.mxu0 0.0
    %297 = vmatpush1.msra.mxu0 0.0
    %298 = vmatprep.subr.mxu0 0.0
    %299 = vmatpush1.msra.mxu0 0.0
    %300 = vmatprep.subr.mxu0 0.0
    %301 = vmatpush1.msra.mxu0 0.0
    %302 = vmatprep.subr.mxu0 0.0
    %303 = vmatpush1.msra.mxu0 0.0
    %304 = vmatprep.subr.mxu0 0.0
    %305 = vmatpush1.msra.mxu0 0.0
    %306 = vmatprep.subr.mxu0 0.0
    %307 = vmatpush1.msra.mxu0 0.0
    %308 = vmatprep.subr.mxu0 0.0
    %309 = vmatpush1.msra.mxu0 0.0
    %310 = vmatprep.subr.mxu0 0.0
    %311 = vmatpush1.msra.mxu0 0.0
    %312 = vmatprep.subr.mxu0 0.0
    %313 = vmatpush1.msra.mxu0 0.0
    %314 = vmatprep.subr.mxu0 0.0
    %315 = vmatpush1.msra.mxu0 0.0
    %316 = vmatprep.subr.mxu0 0.0
    %317 = vmatpush1.msra.mxu0 0.0
    %318 = vmatprep.subr.mxu0 0.0
    %319 = vmatpush1.msra.mxu0 0.0
    %320 = vmatprep.subr.mxu0 0.0
    %321 = vmatpush1.msra.mxu0 0.0
    %322 = vmatprep.subr.mxu0 0.0
    %323 = vmatpush1.msra.mxu0 0.0
    %324 = vmatprep.subr.mxu0 0.0
    %325 = vmatpush1.msra.mxu0 0.0
    %326 = vmatprep.subr.mxu0 0.0
    %327 = vmatpush1.msra.mxu0 0.0
    %328 = vmatprep.mubr.f32.mxu0 0.0
    %329 = vmatmul.mubr.f32.gmra.mrb[0].mxu0 %v262
    %v330 = vpop.f32.mrb[0].mxu0
    %v331 = vadd.f32 0.0, %v330
    %v332 = vpop.f32.mrb[0].mxu0
    %333 = vdwg.mxu0
    %v334 = vadd.f32 %v259, %v331
    %v335 = vtanh.pop %v334
    %v336 = vxor.u32 %v334, 2147483648
    %v337 = vmul.f32 %v336, 1.442695
    %v338 = vpow.pop %v337
    %v339 = vadd.f32 %v338, 1.0
    %v340 = vrcp.pop %v339
    %v341 = vmul.f32 1.0, %v340
    %v342 = vsel %vm258, %v335, %v341
    %v343 = vmul.f32 %v342, 0.0
    %345 = vrot.lane.b32.xlu0 %v342, 64
    %v346 = vpop.permute.xlu0 %345
    %v348 = vmul.f32 %v342, %v346
    %350 = vrot.lane.b32.xlu0 %v348, 32
    %v351 = vpop.permute.xlu0 %350
    %v353 = vadd.f32 %v343, %v351
    %v354 = vtanh.pop %v353
    %356 = vrot.lane.b32.xlu0 %v354, 64
    %v357 = vpop.permute.xlu0 %356
    %v359 = vmul.f32 %v342, %v357
    %s360 = scalar_lea.vmem [#allocation2], 8
    %v361 = vld [vmem:[%s360] sm:$0xff]
    %363 = vrot.lane.b32.xlu0 %v359, 32
    %v364 = vpop.permute.xlu0 %363
    %v365 = vsel %vm260, %v364, 0
    %367 = vmatprep.subr.mxu0 0.0
    %368 = vmatpush1.msra.mxu0 %v250
    %369 = vmatprep.subr.mxu0 0.0
    %370 = vmatpush1.msra.mxu0 %v251
    %371 = vmatprep.subr.mxu0 0.0
    %372 = vmatpush1.msra.mxu0 %v252
    %373 = vmatprep.subr.mxu0 0.0
    %374 = vmatpush1.msra.mxu0 %v253
    %375 = vmatprep.subr.mxu0 0.0
    %376 = vmatpush1.msra.mxu0 0.0
    %377 = vmatprep.subr.mxu0 0.0
    %378 = vmatpush1.msra.mxu0 0.0
    %379 = vmatprep.subr.mxu0 0.0
    %380 = vmatpush1.msra.mxu0 0.0
    %381 = vmatprep.subr.mxu0 0.0
    %382 = vmatpush1.msra.mxu0 0.0
    %383 = vmatprep.subr.mxu0 0.0
    %384 = vmatpush1.msra.mxu0 0.0
    %385 = vmatprep.subr.mxu0 0.0
    %386 = vmatpush1.msra.mxu0 0.0
    %387 = vmatprep.subr.mxu0 0.0
    %388 = vmatpush1.msra.mxu0 0.0
    %389 = vmatprep.subr.mxu0 0.0
    %390 = vmatpush1.msra.mxu0 0.0
    %391 = vmatprep.subr.mxu0 0.0
    %392 = vmatpush1.msra.mxu0 0.0
    %393 = vmatprep.subr.mxu0 0.0
    %394 = vmatpush1.msra.mxu0 0.0
    %395 = vmatprep.subr.mxu0 0.0
    %396 = vmatpush1.msra.mxu0 0.0
    %397 = vmatprep.subr.mxu0 0.0
    %398 = vmatpush1.msra.mxu0 0.0
    %399 = vmatprep.subr.mxu0 0.0
    %400 = vmatpush1.msra.mxu0 0.0
    %401 = vmatprep.subr.mxu0 0.0
    %402 = vmatpush1.msra.mxu0 0.0
    %403 = vmatprep.subr.mxu0 0.0
    %404 = vmatpush1.msra.mxu0 0.0
    %405 = vmatprep.subr.mxu0 0.0
    %406 = vmatpush1.msra.mxu0 0.0
    %407 = vmatprep.subr.mxu0 0.0
    %408 = vmatpush1.msra.mxu0 0.0
    %409 = vmatprep.subr.mxu0 0.0
    %410 = vmatpush1.msra.mxu0 0.0
    %411 = vmatprep.subr.mxu0 0.0
    %412 = vmatpush1.msra.mxu0 0.0
    %413 = vmatprep.subr.mxu0 0.0
    %414 = vmatpush1.msra.mxu0 0.0
    %415 = vmatprep.subr.mxu0 0.0
    %416 = vmatpush1.msra.mxu0 0.0
    %417 = vmatprep.subr.mxu0 0.0
    %418 = vmatpush1.msra.mxu0 0.0
    %419 = vmatprep.subr.mxu0 0.0
    %420 = vmatpush1.msra.mxu0 0.0
    %421 = vmatprep.subr.mxu0 0.0
    %422 = vmatpush1.msra.mxu0 0.0
    %423 = vmatprep.subr.mxu0 0.0
    %424 = vmatpush1.msra.mxu0 0.0
    %425 = vmatprep.subr.mxu0 0.0
    %426 = vmatpush1.msra.mxu0 0.0
    %427 = vmatprep.subr.mxu0 0.0
    %428 = vmatpush1.msra.mxu0 0.0
    %429 = vmatprep.subr.mxu0 0.0
    %430 = vmatpush1.msra.mxu0 0.0
    %431 = vmatprep.mubr.f32.mxu0 0.0
    %432 = vmatmul.mubr.f32.gmra.mrb[0].mxu0 %v365
    %v433 = vpop.f32.mrb[0].mxu0
    %v434 = vadd.f32 0.0, %v433
    %v435 = vpop.f32.mrb[0].mxu0
    %436 = vdwg.mxu0
    %v437 = vadd.f32 %v361, %v434
    %v438 = vtanh.pop %v437
    %v439 = vxor.u32 %v437, 2147483648
    %v440 = vmul.f32 %v439, 1.442695
    %v441 = vpow.pop %v440
    %v442 = vadd.f32 %v441, 1.0
    %v443 = vrcp.pop %v442
    %v444 = vmul.f32 1.0, %v443
    %v445 = vsel %vm258, %v438, %v444
    %v446 = vmul.f32 %v445, %v353
    %448 = vrot.lane.b32.xlu0 %v445, 64
    %v449 = vpop.permute.xlu0 %448
    %v451 = vmul.f32 %v445, %v449
    %453 = vrot.lane.b32.xlu0 %v451, 32
    %v454 = vpop.permute.xlu0 %453
    %v456 = vadd.f32 %v446, %v454
    %v457 = vtanh.pop %v456
    %459 = vrot.lane.b32.xlu0 %v457, 64
    %v460 = vpop.permute.xlu0 %459
    %v462 = vmul.f32 %v445, %v460
    %s463 = scalar_lea.vmem [#allocation2], 16
    %v464 = vld [vmem:[%s463] sm:$0xff]
    %466 = vrot.lane.b32.xlu0 %v462, 32
    %v467 = vpop.permute.xlu0 %466
    %v468 = vsel %vm260, %v467, 0
    %470 = vmatprep.subr.mxu0 0.0
    %471 = vmatpush1.msra.mxu0 %v250
    %472 = vmatprep.subr.mxu0 0.0
    %473 = vmatpush1.msra.mxu0 %v251
    %474 = vmatprep.subr.mxu0 0.0
    %475 = vmatpush1.msra.mxu0 %v252
    %476 = vmatprep.subr.mxu0 0.0
    %477 = vmatpush1.msra.mxu0 %v253
    %478 = vmatprep.subr.mxu0 0.0
    %479 = vmatpush1.msra.mxu0 0.0
    %480 = vmatprep.subr.mxu0 0.0
    %481 = vmatpush1.msra.mxu0 0.0
    %482 = vmatprep.subr.mxu0 0.0
    %483 = vmatpush1.msra.mxu0 0.0
    %484 = vmatprep.subr.mxu0 0.0
    %485 = vmatpush1.msra.mxu0 0.0
    %486 = vmatprep.subr.mxu0 0.0
    %487 = vmatpush1.msra.mxu0 0.0
    %488 = vmatprep.subr.mxu0 0.0
    %489 = vmatpush1.msra.mxu0 0.0
    %490 = vmatprep.subr.mxu0 0.0
    %491 = vmatpush1.msra.mxu0 0.0
    %492 = vmatprep.subr.mxu0 0.0
    %493 = vmatpush1.msra.mxu0 0.0
    %494 = vmatprep.subr.mxu0 0.0
    %495 = vmatpush1.msra.mxu0 0.0
    %496 = vmatprep.subr.mxu0 0.0
    %497 = vmatpush1.msra.mxu0 0.0
    %498 = vmatprep.subr.mxu0 0.0
    %499 = vmatpush1.msra.mxu0 0.0
    %500 = vmatprep.subr.mxu0 0.0
    %501 = vmatpush1.msra.mxu0 0.0
    %502 = vmatprep.subr.mxu0 0.0
    %503 = vmatpush1.msra.mxu0 0.0
    %504 = vmatprep.subr.mxu0 0.0
    %505 = vmatpush1.msra.mxu0 0.0
    %506 = vmatprep.subr.mxu0 0.0
    %507 = vmatpush1.msra.mxu0 0.0
    %508 = vmatprep.subr.mxu0 0.0
    %509 = vmatpush1.msra.mxu0 0.0
    %510 = vmatprep.subr.mxu0 0.0
    %511 = vmatpush1.msra.mxu0 0.0
    %512 = vmatprep.subr.mxu0 0.0
    %513 = vmatpush1.msra.mxu0 0.0
    %514 = vmatprep.subr.mxu0 0.0
    %515 = vmatpush1.msra.mxu0 0.0
    %516 = vmatprep.subr.mxu0 0.0
    %517 = vmatpush1.msra.mxu0 0.0
    %518 = vmatprep.subr.mxu0 0.0
    %519 = vmatpush1.msra.mxu0 0.0
    %520 = vmatprep.subr.mxu0 0.0
    %521 = vmatpush1.msra.mxu0 0.0
    %522 = vmatprep.subr.mxu0 0.0
    %523 = vmatpush1.msra.mxu0 0.0
    %524 = vmatprep.subr.mxu0 0.0
    %525 = vmatpush1.msra.mxu0 0.0
    %526 = vmatprep.subr.mxu0 0.0
    %527 = vmatpush1.msra.mxu0 0.0
    %528 = vmatprep.subr.mxu0 0.0
    %529 = vmatpush1.msra.mxu0 0.0
    %530 = vmatprep.subr.mxu0 0.0
    %531 = vmatpush1.msra.mxu0 0.0
    %532 = vmatprep.subr.mxu0 0.0
    %533 = vmatpush1.msra.mxu0 0.0
    %534 = vmatprep.mubr.f32.mxu0 0.0
    %535 = vmatmul.mubr.f32.gmra.mrb[0].mxu0 %v468
    %v536 = vpop.f32.mrb[0].mxu0
    %v537 = vadd.f32 0.0, %v536
    %v538 = vpop.f32.mrb[0].mxu0
    %539 = vdwg.mxu0
    %v540 = vadd.f32 %v464, %v537
    %v541 = vtanh.pop %v540
    %v542 = vxor.u32 %v540, 2147483648
    %v543 = vmul.f32 %v542, 1.442695
    %v544 = vpow.pop %v543
    %v545 = vadd.f32 %v544, 1.0
    %v546 = vrcp.pop %v545
    %v547 = vmul.f32 1.0, %v546
    %v548 = vsel %vm258, %v541, %v547
    %v549 = vmul.f32 %v548, %v456
    %551 = vrot.lane.b32.xlu0 %v548, 64
    %v552 = vpop.permute.xlu0 %551
    %v554 = vmul.f32 %v548, %v552
    %556 = vrot.lane.b32.xlu0 %v554, 32
    %v557 = vpop.permute.xlu0 %556
    %v559 = vadd.f32 %v549, %v557
    %v560 = vtanh.pop %v559
    %562 = vrot.lane.b32.xlu0 %v560, 64
    %v563 = vpop.permute.xlu0 %562
    %v565 = vmul.f32 %v548, %v563
    %s566 = scalar_lea.vmem [#allocation2], 24
    %v567 = vld [vmem:[%s566] sm:$0xff]
    %569 = vrot.lane.b32.xlu0 %v565, 32
    %v570 = vpop.permute.xlu0 %569
    %v571 = vsel %vm260, %v570, 0
    %573 = vmatprep.subr.mxu0 0.0
    %574 = vmatpush1.msra.mxu0 %v250
    %575 = vmatprep.subr.mxu0 0.0
    %576 = vmatpush1.msra.mxu0 %v251
    %577 = vmatprep.subr.mxu0 0.0
    %578 = vmatpush1.msra.mxu0 %v252
    %579 = vmatprep.subr.mxu0 0.0
    %580 = vmatpush1.msra.mxu0 %v253
    %581 = vmatprep.subr.mxu0 0.0
    %582 = vmatpush1.msra.mxu0 0.0
    %583 = vmatprep.subr.mxu0 0.0
    %584 = vmatpush1.msra.mxu0 0.0
    %585 = vmatprep.subr.mxu0 0.0
    %586 = vmatpush1.msra.mxu0 0.0
    %587 = vmatprep.subr.mxu0 0.0
    %588 = vmatpush1.msra.mxu0 0.0
    %589 = vmatprep.subr.mxu0 0.0
    %590 = vmatpush1.msra.mxu0 0.0
    %591 = vmatprep.subr.mxu0 0.0
    %592 = vmatpush1.msra.mxu0 0.0
    %593 = vmatprep.subr.mxu0 0.0
    %594 = vmatpush1.msra.mxu0 0.0
    %595 = vmatprep.subr.mxu0 0.0
    %596 = vmatpush1.msra.mxu0 0.0
    %597 = vmatprep.subr.mxu0 0.0
    %598 = vmatpush1.msra.mxu0 0.0
    %599 = vmatprep.subr.mxu0 0.0
    %600 = vmatpush1.msra.mxu0 0.0
    %601 = vmatprep.subr.mxu0 0.0
    %602 = vmatpush1.msra.mxu0 0.0
    %603 = vmatprep.subr.mxu0 0.0
    %604 = vmatpush1.msra.mxu0 0.0
    %605 = vmatprep.subr.mxu0 0.0
    %606 = vmatpush1.msra.mxu0 0.0
    %607 = vmatprep.subr.mxu0 0.0
    %608 = vmatpush1.msra.mxu0 0.0
    %609 = vmatprep.subr.mxu0 0.0
    %610 = vmatpush1.msra.mxu0 0.0
    %611 = vmatprep.subr.mxu0 0.0
    %612 = vmatpush1.msra.mxu0 0.0
    %613 = vmatprep.subr.mxu0 0.0
    %614 = vmatpush1.msra.mxu0 0.0
    %615 = vmatprep.subr.mxu0 0.0
    %616 = vmatpush1.msra.mxu0 0.0
    %617 = vmatprep.subr.mxu0 0.0
    %618 = vmatpush1.msra.mxu0 0.0
    %619 = vmatprep.subr.mxu0 0.0
    %620 = vmatpush1.msra.mxu0 0.0
    %621 = vmatprep.subr.mxu0 0.0
    %622 = vmatpush1.msra.mxu0 0.0
    %623 = vmatprep.subr.mxu0 0.0
    %624 = vmatpush1.msra.mxu0 0.0
    %625 = vmatprep.subr.mxu0 0.0
    %626 = vmatpush1.msra.mxu0 0.0
    %627 = vmatprep.subr.mxu0 0.0
    %628 = vmatpush1.msra.mxu0 0.0
    %629 = vmatprep.subr.mxu0 0.0
    %630 = vmatpush1.msra.mxu0 0.0
    %631 = vmatprep.subr.mxu0 0.0
    %632 = vmatpush1.msra.mxu0 0.0
    %633 = vmatprep.subr.mxu0 0.0
    %634 = vmatpush1.msra.mxu0 0.0
    %635 = vmatprep.subr.mxu0 0.0
    %636 = vmatpush1.msra.mxu0 0.0
    %637 = vmatprep.mubr.f32.mxu0 0.0
    %638 = vmatmul.mubr.f32.gmra.mrb[0].mxu0 %v571
    %v639 = vpop.f32.mrb[0].mxu0
    %v640 = vadd.f32 0.0, %v639
    %v641 = vpop.f32.mrb[0].mxu0
    %642 = vdwg.mxu0
    %v643 = vadd.f32 %v567, %v640
    %v644 = vtanh.pop %v643
    %v645 = vxor.u32 %v643, 2147483648
    %v646 = vmul.f32 %v645, 1.442695
    %v647 = vpow.pop %v646
    %v648 = vadd.f32 %v647, 1.0
    %v649 = vrcp.pop %v648
    %v650 = vmul.f32 1.0, %v649
    %v651 = vsel %vm258, %v644, %v650
    %v652 = vmul.f32 %v651, %v559
    %654 = vrot.lane.b32.xlu0 %v651, 64
    %v655 = vpop.permute.xlu0 %654
    %v657 = vmul.f32 %v651, %v655
    %659 = vrot.lane.b32.xlu0 %v657, 32
    %v660 = vpop.permute.xlu0 %659
    %v662 = vadd.f32 %v652, %v660
    %v663 = vtanh.pop %v662
    %665 = vrot.lane.b32.xlu0 %v663, 64
    %v666 = vpop.permute.xlu0 %665
    %v668 = vmul.f32 %v651, %v666
    %s669 = scalar_lea.vmem [#allocation2], 32
    %v670 = vld [vmem:[%s669] sm:$0xff]
    %672 = vrot.lane.b32.xlu0 %v668, 32
    %v673 = vpop.permute.xlu0 %672
    %v674 = vsel %vm260, %v673, 0
    %676 = vmatprep.subr.mxu0 0.0
    %677 = vmatpush1.msra.mxu0 %v250
    %678 = vmatprep.subr.mxu0 0.0
    %679 = vmatpush1.msra.mxu0 %v251
    %680 = vmatprep.subr.mxu0 0.0
    %681 = vmatpush1.msra.mxu0 %v252
    %682 = vmatprep.subr.mxu0 0.0
    %683 = vmatpush1.msra.mxu0 %v253
    %684 = vmatprep.subr.mxu0 0.0
    %685 = vmatpush1.msra.mxu0 0.0
    %686 = vmatprep.subr.mxu0 0.0
    %687 = vmatpush1.msra.mxu0 0.0
    %688 = vmatprep.subr.mxu0 0.0
    %689 = vmatpush1.msra.mxu0 0.0
    %690 = vmatprep.subr.mxu0 0.0
    %691 = vmatpush1.msra.mxu0 0.0
    %692 = vmatprep.subr.mxu0 0.0
    %693 = vmatpush1.msra.mxu0 0.0
    %694 = vmatprep.subr.mxu0 0.0
    %695 = vmatpush1.msra.mxu0 0.0
    %696 = vmatprep.subr.mxu0 0.0
    %697 = vmatpush1.msra.mxu0 0.0
    %698 = vmatprep.subr.mxu0 0.0
    %699 = vmatpush1.msra.mxu0 0.0
    %700 = vmatprep.subr.mxu0 0.0
    %701 = vmatpush1.msra.mxu0 0.0
    %702 = vmatprep.subr.mxu0 0.0
    %703 = vmatpush1.msra.mxu0 0.0
    %704 = vmatprep.subr.mxu0 0.0
    %705 = vmatpush1.msra.mxu0 0.0
    %706 = vmatprep.subr.mxu0 0.0
    %707 = vmatpush1.msra.mxu0 0.0
    %708 = vmatprep.subr.mxu0 0.0
    %709 = vmatpush1.msra.mxu0 0.0
    %710 = vmatprep.subr.mxu0 0.0
    %711 = vmatpush1.msra.mxu0 0.0
    %712 = vmatprep.subr.mxu0 0.0
    %713 = vmatpush1.msra.mxu0 0.0
    %714 = vmatprep.subr.mxu0 0.0
    %715 = vmatpush1.msra.mxu0 0.0
    %716 = vmatprep.subr.mxu0 0.0
    %717 = vmatpush1.msra.mxu0 0.0
    %718 = vmatprep.subr.mxu0 0.0
    %719 = vmatpush1.msra.mxu0 0.0
    %720 = vmatprep.subr.mxu0 0.0
    %721 = vmatpush1.msra.mxu0 0.0
    %722 = vmatprep.subr.mxu0 0.0
    %723 = vmatpush1.msra.mxu0 0.0
    %724 = vmatprep.subr.mxu0 0.0
    %725 = vmatpush1.msra.mxu0 0.0
    %726 = vmatprep.subr.mxu0 0.0
    %727 = vmatpush1.msra.mxu0 0.0
    %728 = vmatprep.subr.mxu0 0.0
    %729 = vmatpush1.msra.mxu0 0.0
    %730 = vmatprep.subr.mxu0 0.0
    %731 = vmatpush1.msra.mxu0 0.0
    %732 = vmatprep.subr.mxu0 0.0
    %733 = vmatpush1.msra.mxu0 0.0
    %734 = vmatprep.subr.mxu0 0.0
    %735 = vmatpush1.msra.mxu0 0.0
    %736 = vmatprep.subr.mxu0 0.0
    %737 = vmatpush1.msra.mxu0 0.0
    %738 = vmatprep.subr.mxu0 0.0
    %739 = vmatpush1.msra.mxu0 0.0
    %740 = vmatprep.mubr.f32.mxu0 0.0
    %741 = vmatmul.mubr.f32.gmra.mrb[0].mxu0 %v674
    %v742 = vpop.f32.mrb[0].mxu0
    %v743 = vadd.f32 0.0, %v742
    %v744 = vpop.f32.mrb[0].mxu0
    %745 = vdwg.mxu0
    %v746 = vadd.f32 %v670, %v743
    %v747 = vtanh.pop %v746
    %v748 = vxor.u32 %v746, 2147483648
    %v749 = vmul.f32 %v748, 1.442695
    %v750 = vpow.pop %v749
    %v751 = vadd.f32 %v750, 1.0
    %v752 = vrcp.pop %v751
    %v753 = vmul.f32 1.0, %v752
    %v754 = vsel %vm258, %v747, %v753
    %v755 = vmul.f32 %v754, %v662
    %757 = vrot.lane.b32.xlu0 %v754, 64
    %v758 = vpop.permute.xlu0 %757
    %v760 = vmul.f32 %v754, %v758
    %762 = vrot.lane.b32.xlu0 %v760, 32
    %v763 = vpop.permute.xlu0 %762
    %v765 = vadd.f32 %v755, %v763
    %v766 = vtanh.pop %v765
    %768 = vrot.lane.b32.xlu0 %v766, 64
    %v769 = vpop.permute.xlu0 %768
    %v771 = vmul.f32 %v754, %v769
    %s772 = scalar_lea.vmem [#allocation2], 40
    %v773 = vld [vmem:[%s772] sm:$0xff]
    %775 = vrot.lane.b32.xlu0 %v771, 32
    %v776 = vpop.permute.xlu0 %775
    %v777 = vsel %vm260, %v776, 0
    %779 = vmatprep.subr.mxu0 0.0
    %780 = vmatpush1.msra.mxu0 %v250
    %781 = vmatprep.subr.mxu0 0.0
    %782 = vmatpush1.msra.mxu0 %v251
    %783 = vmatprep.subr.mxu0 0.0
    %784 = vmatpush1.msra.mxu0 %v252
    %785 = vmatprep.subr.mxu0 0.0
    %786 = vmatpush1.msra.mxu0 %v253
    %787 = vmatprep.subr.mxu0 0.0
    %788 = vmatpush1.msra.mxu0 0.0
    %789 = vmatprep.subr.mxu0 0.0
    %790 = vmatpush1.msra.mxu0 0.0
    %791 = vmatprep.subr.mxu0 0.0
    %792 = vmatpush1.msra.mxu0 0.0
    %793 = vmatprep.subr.mxu0 0.0
    %794 = vmatpush1.msra.mxu0 0.0
    %795 = vmatprep.subr.mxu0 0.0
    %796 = vmatpush1.msra.mxu0 0.0
    %797 = vmatprep.subr.mxu0 0.0
    %798 = vmatpush1.msra.mxu0 0.0
    %799 = vmatprep.subr.mxu0 0.0
    %800 = vmatpush1.msra.mxu0 0.0
    %801 = vmatprep.subr.mxu0 0.0
    %802 = vmatpush1.msra.mxu0 0.0
    %803 = vmatprep.subr.mxu0 0.0
    %804 = vmatpush1.msra.mxu0 0.0
    %805 = vmatprep.subr.mxu0 0.0
    %806 = vmatpush1.msra.mxu0 0.0
    %807 = vmatprep.subr.mxu0 0.0
    %808 = vmatpush1.msra.mxu0 0.0
    %809 = vmatprep.subr.mxu0 0.0
    %810 = vmatpush1.msra.mxu0 0.0
    %811 = vmatprep.subr.mxu0 0.0
    %812 = vmatpush1.msra.mxu0 0.0
    %813 = vmatprep.subr.mxu0 0.0
    %814 = vmatpush1.msra.mxu0 0.0
    %815 = vmatprep.subr.mxu0 0.0
    %816 = vmatpush1.msra.mxu0 0.0
    %817 = vmatprep.subr.mxu0 0.0
    %818 = vmatpush1.msra.mxu0 0.0
    %819 = vmatprep.subr.mxu0 0.0
    %820 = vmatpush1.msra.mxu0 0.0
    %821 = vmatprep.subr.mxu0 0.0
    %822 = vmatpush1.msra.mxu0 0.0
    %823 = vmatprep.subr.mxu0 0.0
    %824 = vmatpush1.msra.mxu0 0.0
    %825 = vmatprep.subr.mxu0 0.0
    %826 = vmatpush1.msra.mxu0 0.0
    %827 = vmatprep.subr.mxu0 0.0
    %828 = vmatpush1.msra.mxu0 0.0
    %829 = vmatprep.subr.mxu0 0.0
    %830 = vmatpush1.msra.mxu0 0.0
    %831 = vmatprep.subr.mxu0 0.0
    %832 = vmatpush1.msra.mxu0 0.0
    %833 = vmatprep.subr.mxu0 0.0
    %834 = vmatpush1.msra.mxu0 0.0
    %835 = vmatprep.subr.mxu0 0.0
    %836 = vmatpush1.msra.mxu0 0.0
    %837 = vmatprep.subr.mxu0 0.0
    %838 = vmatpush1.msra.mxu0 0.0
    %839 = vmatprep.subr.mxu0 0.0
    %840 = vmatpush1.msra.mxu0 0.0
    %841 = vmatprep.subr.mxu0 0.0
    %842 = vmatpush1.msra.mxu0 0.0
    %843 = vmatprep.mubr.f32.mxu0 0.0
    %844 = vmatmul.mubr.f32.gmra.mrb[0].mxu0 %v777
    %v845 = vpop.f32.mrb[0].mxu0
    %v846 = vadd.f32 0.0, %v845
    %v847 = vpop.f32.mrb[0].mxu0
    %848 = vdwg.mxu0
    %v849 = vadd.f32 %v773, %v846
    %v850 = vtanh.pop %v849
    %v851 = vxor.u32 %v849, 2147483648
    %v852 = vmul.f32 %v851, 1.442695
    %v853 = vpow.pop %v852
    %v854 = vadd.f32 %v853, 1.0
    %v855 = vrcp.pop %v854
    %v856 = vmul.f32 1.0, %v855
    %v857 = vsel %vm258, %v850, %v856
    %v858 = vmul.f32 %v857, %v765
    %860 = vrot.lane.b32.xlu0 %v857, 64
    %v861 = vpop.permute.xlu0 %860
    %v863 = vmul.f32 %v857, %v861
    %865 = vrot.lane.b32.xlu0 %v863, 32
    %v866 = vpop.permute.xlu0 %865
    %v868 = vadd.f32 %v858, %v866
    %v869 = vtanh.pop %v868
    %871 = vrot.lane.b32.xlu0 %v869, 64
    %v872 = vpop.permute.xlu0 %871
    %v874 = vmul.f32 %v857, %v872
    %s875 = scalar_lea.vmem [#allocation2], 48
    %v876 = vld [vmem:[%s875] sm:$0xff]
    %878 = vrot.lane.b32.xlu0 %v874, 32
    %v879 = vpop.permute.xlu0 %878
    %v880 = vsel %vm260, %v879, 0
    %882 = vmatprep.subr.mxu0 0.0
    %883 = vmatpush1.msra.mxu0 %v250
    %884 = vmatprep.subr.mxu0 0.0
    %885 = vmatpush1.msra.mxu0 %v251
    %886 = vmatprep.subr.mxu0 0.0
    %887 = vmatpush1.msra.mxu0 %v252
    %888 = vmatprep.subr.mxu0 0.0
    %889 = vmatpush1.msra.mxu0 %v253
    %890 = vmatprep.subr.mxu0 0.0
    %891 = vmatpush1.msra.mxu0 0.0
    %892 = vmatprep.subr.mxu0 0.0
    %893 = vmatpush1.msra.mxu0 0.0
    %894 = vmatprep.subr.mxu0 0.0
    %895 = vmatpush1.msra.mxu0 0.0
    %896 = vmatprep.subr.mxu0 0.0
    %897 = vmatpush1.msra.mxu0 0.0
    %898 = vmatprep.subr.mxu0 0.0
    %899 = vmatpush1.msra.mxu0 0.0
    %900 = vmatprep.subr.mxu0 0.0
    %901 = vmatpush1.msra.mxu0 0.0
    %902 = vmatprep.subr.mxu0 0.0
    %903 = vmatpush1.msra.mxu0 0.0
    %904 = vmatprep.subr.mxu0 0.0
    %905 = vmatpush1.msra.mxu0 0.0
    %906 = vmatprep.subr.mxu0 0.0
    %907 = vmatpush1.msra.mxu0 0.0
    %908 = vmatprep.subr.mxu0 0.0
    %909 = vmatpush1.msra.mxu0 0.0
    %910 = vmatprep.subr.mxu0 0.0
    %911 = vmatpush1.msra.mxu0 0.0
    %912 = vmatprep.subr.mxu0 0.0
    %913 = vmatpush1.msra.mxu0 0.0
    %914 = vmatprep.subr.mxu0 0.0
    %915 = vmatpush1.msra.mxu0 0.0
    %916 = vmatprep.subr.mxu0 0.0
    %917 = vmatpush1.msra.mxu0 0.0
    %918 = vmatprep.subr.mxu0 0.0
    %919 = vmatpush1.msra.mxu0 0.0
    %920 = vmatprep.subr.mxu0 0.0
    %921 = vmatpush1.msra.mxu0 0.0
    %922 = vmatprep.subr.mxu0 0.0
    %923 = vmatpush1.msra.mxu0 0.0
    %924 = vmatprep.subr.mxu0 0.0
    %925 = vmatpush1.msra.mxu0 0.0
    %926 = vmatprep.subr.mxu0 0.0
    %927 = vmatpush1.msra.mxu0 0.0
    %928 = vmatprep.subr.mxu0 0.0
    %929 = vmatpush1.msra.mxu0 0.0
    %930 = vmatprep.subr.mxu0 0.0
    %931 = vmatpush1.msra.mxu0 0.0
    %932 = vmatprep.subr.mxu0 0.0
    %933 = vmatpush1.msra.mxu0 0.0
    %934 = vmatprep.subr.mxu0 0.0
    %935 = vmatpush1.msra.mxu0 0.0
    %936 = vmatprep.subr.mxu0 0.0
    %937 = vmatpush1.msra.mxu0 0.0
    %938 = vmatprep.subr.mxu0 0.0
    %939 = vmatpush1.msra.mxu0 0.0
    %940 = vmatprep.subr.mxu0 0.0
    %941 = vmatpush1.msra.mxu0 0.0
    %942 = vmatprep.subr.mxu0 0.0
    %943 = vmatpush1.msra.mxu0 0.0
    %944 = vmatprep.subr.mxu0 0.0
    %945 = vmatpush1.msra.mxu0 0.0
    %946 = vmatprep.mubr.f32.mxu0 0.0
    %947 = vmatmul.mubr.f32.gmra.mrb[0].mxu0 %v880
    %v948 = vpop.f32.mrb[0].mxu0
    %v949 = vadd.f32 0.0, %v948
    %v950 = vpop.f32.mrb[0].mxu0
    %951 = vdwg.mxu0
    %v952 = vadd.f32 %v876, %v949
    %v953 = vtanh.pop %v952
    %v954 = vxor.u32 %v952, 2147483648
    %v955 = vmul.f32 %v954, 1.442695
    %v956 = vpow.pop %v955
    %v957 = vadd.f32 %v956, 1.0
    %v958 = vrcp.pop %v957
    %v959 = vmul.f32 1.0, %v958
    %v960 = vsel %vm258, %v953, %v959
    %v961 = vmul.f32 %v960, %v868
    %963 = vrot.lane.b32.xlu0 %v960, 64
    %v964 = vpop.permute.xlu0 %963
    %v966 = vmul.f32 %v960, %v964
    %968 = vrot.lane.b32.xlu0 %v966, 32
    %v969 = vpop.permute.xlu0 %968
    %v971 = vadd.f32 %v961, %v969
    %v972 = vtanh.pop %v971
    %974 = vrot.lane.b32.xlu0 %v972, 64
    %v975 = vpop.permute.xlu0 %974
    %v977 = vmul.f32 %v960, %v975
    %s978 = scalar_lea.vmem [#allocation2], 56
    %v979 = vld [vmem:[%s978] sm:$0xff]
    %981 = vrot.lane.b32.xlu0 %v977, 32
    %v982 = vpop.permute.xlu0 %981
    %v983 = vsel %vm260, %v982, 0
    %985 = vmatprep.subr.mxu0 0.0
    %986 = vmatpush1.msra.mxu0 %v250
    %987 = vmatprep.subr.mxu0 0.0
    %988 = vmatpush1.msra.mxu0 %v251
    %989 = vmatprep.subr.mxu0 0.0
    %990 = vmatpush1.msra.mxu0 %v252
    %991 = vmatprep.subr.mxu0 0.0
    %992 = vmatpush1.msra.mxu0 %v253
    %993 = vmatprep.subr.mxu0 0.0
    %994 = vmatpush1.msra.mxu0 0.0
    %995 = vmatprep.subr.mxu0 0.0
    %996 = vmatpush1.msra.mxu0 0.0
    %997 = vmatprep.subr.mxu0 0.0
    %998 = vmatpush1.msra.mxu0 0.0
    %999 = vmatprep.subr.mxu0 0.0
    %1000 = vmatpush1.msra.mxu0 0.0
    %1001 = vmatprep.subr.mxu0 0.0
    %1002 = vmatpush1.msra.mxu0 0.0
    %1003 = vmatprep.subr.mxu0 0.0
    %1004 = vmatpush1.msra.mxu0 0.0
    %1005 = vmatprep.subr.mxu0 0.0
    %1006 = vmatpush1.msra.mxu0 0.0
    %1007 = vmatprep.subr.mxu0 0.0
    %1008 = vmatpush1.msra.mxu0 0.0
    %1009 = vmatprep.subr.mxu0 0.0
    %1010 = vmatpush1.msra.mxu0 0.0
    %1011 = vmatprep.subr.mxu0 0.0
    %1012 = vmatpush1.msra.mxu0 0.0
    %1013 = vmatprep.subr.mxu0 0.0
    %1014 = vmatpush1.msra.mxu0 0.0
    %1015 = vmatprep.subr.mxu0 0.0
    %1016 = vmatpush1.msra.mxu0 0.0
    %1017 = vmatprep.subr.mxu0 0.0
    %1018 = vmatpush1.msra.mxu0 0.0
    %1019 = vmatprep.subr.mxu0 0.0
    %1020 = vmatpush1.msra.mxu0 0.0
    %1021 = vmatprep.subr.mxu0 0.0
    %1022 = vmatpush1.msra.mxu0 0.0
    %1023 = vmatprep.subr.mxu0 0.0
    %1024 = vmatpush1.msra.mxu0 0.0
    %1025 = vmatprep.subr.mxu0 0.0
    %1026 = vmatpush1.msra.mxu0 0.0
    %1027 = vmatprep.subr.mxu0 0.0
    %1028 = vmatpush1.msra.mxu0 0.0
    %1029 = vmatprep.subr.mxu0 0.0
    %1030 = vmatpush1.msra.mxu0 0.0
    %1031 = vmatprep.subr.mxu0 0.0
    %1032 = vmatpush1.msra.mxu0 0.0
    %1033 = vmatprep.subr.mxu0 0.0
    %1034 = vmatpush1.msra.mxu0 0.0
    %1035 = vmatprep.subr.mxu0 0.0
    %1036 = vmatpush1.msra.mxu0 0.0
    %1037 = vmatprep.subr.mxu0 0.0
    %1038 = vmatpush1.msra.mxu0 0.0
    %1039 = vmatprep.subr.mxu0 0.0
    %1040 = vmatpush1.msra.mxu0 0.0
    %1041 = vmatprep.subr.mxu0 0.0
    %1042 = vmatpush1.msra.mxu0 0.0
    %1043 = vmatprep.subr.mxu0 0.0
    %1044 = vmatpush1.msra.mxu0 0.0
    %1045 = vmatprep.subr.mxu0 0.0
    %1046 = vmatpush1.msra.mxu0 0.0
    %1047 = vmatprep.subr.mxu0 0.0
    %1048 = vmatpush1.msra.mxu0 0.0
    %1049 = vmatprep.mubr.f32.mxu0 0.0
    %1050 = vmatmul.mubr.f32.gmra.mrb[0].mxu0 %v983
    %v1051 = vpop.f32.mrb[0].mxu0
    %v1052 = vadd.f32 0.0, %v1051
    %v1053 = vpop.f32.mrb[0].mxu0
    %1054 = vdwg.mxu0
    %v1055 = vadd.f32 %v979, %v1052
    %v1056 = vtanh.pop %v1055
    %v1057 = vxor.u32 %v1055, 2147483648
    %v1058 = vmul.f32 %v1057, 1.442695
    %v1059 = vpow.pop %v1058
    %v1060 = vadd.f32 %v1059, 1.0
    %v1061 = vrcp.pop %v1060
    %v1062 = vmul.f32 1.0, %v1061
    %v1063 = vsel %vm258, %v1056, %v1062
    %v1064 = vmul.f32 %v1063, %v971
    %1066 = vrot.lane.b32.xlu0 %v1063, 64
    %v1067 = vpop.permute.xlu0 %1066
    %v1069 = vmul.f32 %v1063, %v1067
    %1071 = vrot.lane.b32.xlu0 %v1069, 32
    %v1072 = vpop.permute.xlu0 %1071
    %v1074 = vadd.f32 %v1064, %v1072
    %v1075 = vtanh.pop %v1074
    %1077 = vrot.lane.b32.xlu0 %v1075, 64
    %v1078 = vpop.permute.xlu0 %1077
    %v1080 = vmul.f32 %v1063, %v1078
    %1082 = vrot.lane.b32.xlu0 %v1080, 32
    %v1083 = vpop.permute.xlu0 %1082
    %1085 = vst.msk [vmem:[#allocation9] sm:$0xff] %vm260, %v1083
    // Predicated region
    $region30: #{tpu_custom_call.1} parent=1 // pred_check
      _
    $region31: #{tpu_custom_call.1} parent=1 // pred_check_branch
      %1087 = sbr.rel (0) target = $region33
    $region32: #{tpu_custom_call.1} parent=1 // pred_region
      %s1089 = ssub.s32 128, 128
      %1090 = vsyncadd [#allocation5], %s1089
      %s1092 = sshll.u32 [#allocation9], 4
      %s1093 = int_to_ptr.vmem [resolvable:$true] %s1092
      %1095 = dma.vmem_to_hbm [thread:$0]  %s1093, 128, %s4, [#allocation5]
    $region33: #{tpu_custom_call.1} parent=1 // pred_fallthru
      _
    // Predicated region
    $region34: #{tpu_custom_call.1} parent=1 // pred_check
      _
    $region35: #{tpu_custom_call.1} parent=1 // pred_check_branch
      %1097 = sbr.rel (0) target = $region37
    $region36: #{tpu_custom_call.1} parent=1 // pred_region
      %1098 = dma.done [#allocation5], 128
    $region37: #{tpu_custom_call.1} parent=1 // pred_fallthru
      _
    %1099 = vsyncpa [#allocation4], 1
    %1100 = vsyncpa [#allocation7], 1
    %1101 = vsyncpa [#allocation5], 1

</llo_original>
